<compile_context>
chip_gen: v7x
topology: tpu7x:2x2x1
jax: 0.10.0
libtpu: 0.0.40
codegen_flags: <defaults>
</compile_context>

<pallas_src>
import functools

import jax
import jax.numpy as jnp
from jax.experimental import pallas as pl
from jax.experimental.pallas import tpu as pltpu

_EPS = 1e-7     # safe_log epsilon from the PyTorch module
_TM_MAX = 256   # max frames per (input or target) half-tile


# ----------------------------------------------------------------------------
# Small helpers.
# ----------------------------------------------------------------------------
def _round_up(x, m):
    return ((x + m - 1) // m) * m


def _vmem_capacity_bytes():
    try:
        return int(pltpu.get_tpu_info().vmem_capacity_bytes)
    except Exception:
        return 64 * 1024 * 1024   # conservative fallback (v7x per-core VMEM)


def _block_spec(shape, index_map, n_buffers=None):
    """BlockSpec with optional pipeline depth (falls back if kwarg unsupported)."""
    if n_buffers is not None:
        try:
            return pl.BlockSpec(shape, index_map,
                                pipeline_mode=pl.Buffered(n_buffers))
        except (TypeError, AttributeError):
            pass
    return pl.BlockSpec(shape, index_map)


# ----------------------------------------------------------------------------
# Pallas kernel: windowed DFT (optionally K-split) + magnitude + mel + L1 partials.
# ----------------------------------------------------------------------------
def _spectral_kernel(*refs, use_mel, use_log, power, single_k):
    it = iter(refs)
    f_ref = next(it)                            # (2, tm, tk)   [inp ; tar] frames
    w_ref = next(it)                            # (tk, 2*f_pad) [win*cos | -win*sin]
    fb_ref = next(it) if use_mel else None      # (f_pad, m_pad)
    so = next(it)                               # (1, 8, f_pad)
    lo = next(it) if use_log else None
    mo = next(it) if use_mel else None          # (1, 8, m_pad)
    lmo = next(it) if (use_mel and use_log) else None
    acc_a = None if single_k else next(it)      # (tm, 2*f_pad) f32
    acc_b = None if single_k else next(it)

    f_pad = w_ref.shape[1] // 2
    k = pl.program_id(2)

    @pl.when((pl.program_id(1) == 0) & (k == 0))
    def _init_outputs():
        so[...] = jnp.zeros_like(so)
        if use_log:
            lo[...] = jnp.zeros_like(lo)
        if use_mel:
            mo[...] = jnp.zeros_like(mo)
            if use_log:
                lmo[...] = jnp.zeros_like(lmo)

    def _fold_acc(out_ref, diff):
        # Fold (tm, W) -> (8, W) with VPU vreg adds only (no per-step XLU reduce),
        # then accumulate into the resident lane-dense output block.
        g = diff.shape[0] // 8
        part = diff.reshape(g, 8, diff.shape[1]).sum(axis=0)
        out_ref[...] += part[None]

    def _epilogue(ra, rb):
        def mag(reim):
            re = reim[:, :f_pad]
            im = reim[:, f_pad:]
            p2 = re * re + im * im              # |S|^2 (f32)
            if power == 1:
                return jnp.sqrt(p2)             # magnitude spectrogram (default)
            if power == 2:
                return p2                       # power spectrogram
            return jnp.power(jnp.maximum(p2, 1e-30), 0.5 * power)

        sa = mag(ra)
        sb = mag(rb)
        _fold_acc(so, jnp.abs(sa - sb))
        if use_log:
            _fold_acc(lo, jnp.abs(jnp.log(sa + _EPS) - jnp.log(sb + _EPS)))
        if use_mel:
            ma = jnp.dot(sa.astype(fb_ref.dtype), fb_ref[...],
                         preferred_element_type=jnp.float32)
            mb = jnp.dot(sb.astype(fb_ref.dtype), fb_ref[...],
                         preferred_element_type=jnp.float32)
            _fold_acc(mo, jnp.abs(ma - mb))
            if use_log:
                _fold_acc(lmo, jnp.abs(jnp.log(ma + _EPS) - jnp.log(mb + _EPS)))

    # Two MXU matmuls per step (input & target halves of the packed block).
    pa = jnp.dot(f_ref[0], w_ref[...], preferred_element_type=jnp.float32)
    pb = jnp.dot(f_ref[1], w_ref[...], preferred_element_type=jnp.float32)

    if single_k:                                # whole basis resident: no scratch pass
        _epilogue(pa, pb)
    else:                                       # K-split: accumulate re/im, finish at last k
        @pl.when(k == 0)
        def _zero_acc():
            acc_a[...] = jnp.zeros_like(acc_a)
            acc_b[...] = jnp.zeros_like(acc_b)

        acc_a[...] += pa
        acc_b[...] += pb

        @pl.when(k == pl.num_programs(2) - 1)
        def _finish():
            _epilogue(acc_a[...], acc_b[...])


# ----------------------------------------------------------------------------
# Glue: framing, window/DFT basis, mel filterbank (torchaudio semantics).
# ----------------------------------------------------------------------------
def _frame_signal(x, n_fft, hop):
    # torchaudio Spectrogram: center=True, pad_mode='reflect', win_length=n_fft.
    b, length = x.shape
    pad = n_fft // 2
    if pad >= length:
        raise ValueError(
            f"reflect padding requires signal length > n_fft//2 ({length} vs {pad})")
    xp = jnp.pad(x, ((0, 0), (pad, pad)), mode="reflect")
    n_frames = length // hop + 1
    if n_fft % hop == 0:
        # hop-chunk construction (pure strided slices + concat, no gather).
        r = n_fft // hop
        n_chunks = n_frames + r - 1
        ch = xp[:, :n_chunks * hop].reshape(b, n_chunks, hop)
        frames = jnp.concatenate([ch[:, i:i + n_frames] for i in range(r)], axis=-1)
    else:
        idx = jnp.arange(n_frames)[:, None] * hop + jnp.arange(n_fft)[None, :]
        frames = xp[:, idx]
    return frames, n_frames                      # (b, n_frames, n_fft)


def _dft_basis(n_fft, n_freq_pad):
    # Combined windowed-DFT basis: [win*cos | -win*sin], lane-padded to 128 multiples.
    n_freq = n_fft // 2 + 1
    n = jnp.arange(n_fft, dtype=jnp.float32)
    win = 0.5 * (1.0 - jnp.cos(2.0 * jnp.pi * n / n_fft))       # periodic Hann
    # Exact integer (n*f) mod n_fft keeps the angle accurate even for large n_fft.
    nf = (jnp.arange(n_fft, dtype=jnp.int32)[:, None]
          * jnp.arange(n_freq, dtype=jnp.int32)[None, :]) % n_fft
    ang = 2.0 * jnp.pi * nf.astype(jnp.float32) / n_fft
    wc = win[:, None] * jnp.cos(ang)
    ws = -win[:, None] * jnp.sin(ang)
    padc = n_freq_pad - n_freq
    wc = jnp.pad(wc, ((0, 0), (0, padc)))
    ws = jnp.pad(ws, ((0, 0), (0, padc)))
    return jnp.concatenate([wc, ws], axis=1).astype(jnp.float32)  # (n_fft, 2*F_pad)


def _melscale_fbanks(n_freqs, f_min, f_max, n_mels, sample_rate):
    # torchaudio.functional.melscale_fbanks, mel_scale='htk', norm=None.
    all_freqs = jnp.linspace(0.0, float(sample_rate // 2), n_freqs)

    def hz2mel(f):
        return 2595.0 * jnp.log10(1.0 + f / 700.0)

    def mel2hz(m):
        return 700.0 * (10.0 ** (m / 2595.0) - 1.0)

    m_min = hz2mel(jnp.float32(f_min))
    m_max = hz2mel(jnp.float32(f_max))
    m_pts = jnp.linspace(m_min, m_max, n_mels + 2)
    f_pts = mel2hz(m_pts)
    f_diff = f_pts[1:] - f_pts[:-1]
    slopes = f_pts[None, :] - all_freqs[:, None]
    down = -slopes[:, :-2] / f_diff[:-1]
    up = slopes[:, 2:] / f_diff[1:]
    fb = jnp.maximum(0.0, jnp.minimum(down, up))                 # (n_freqs, n_mels)
    return fb.astype(jnp.float32)


# ----------------------------------------------------------------------------
# Per-scale distance via pallas_call.
# ----------------------------------------------------------------------------
def _scale_distance(x_inp, x_tar, n_fft, hop, sr, power=1, n_mels=None,
                    use_log=False, compute_dtype=jnp.bfloat16, force_tk=None):
    assert x_inp.shape == x_tar.shape
    use_mel = n_mels is not None
    B, _ = x_inp.shape

    # Frame input & target in one pass; keep them on a leading axis of size 2 so the
    # kernel block spans both halves (no wrapper-side repacking copy).
    x_both = jnp.concatenate([x_inp, x_tar], axis=0).astype(compute_dtype)  # (2B, L)
    frames, n_frames = _frame_signal(x_both, n_fft, hop)          # (2B, n_frames, n_fft)
    n_rows = B * n_frames
    frames = frames.reshape(2, n_rows, n_fft)

    # Row tiling with minimal padding; 2 parallel chunks (v7x megacore) only when
    # there is enough work for both cores.
    nb = -(-n_rows // _TM_MAX)
    n_chunks = 2 if nb >= 2 else 1
    nb = _round_up(nb, n_chunks)
    tm = max(16, _round_up(-(-n_rows // nb), 16))
    inner = nb // n_chunks
    n_rows_pad = nb * tm

    frames = jnp.pad(frames, ((0, 0), (0, n_rows_pad - n_rows), (0, 0)))
    frames = frames.reshape(2, nb, tm, n_fft)                     # packed HBM layout

    n_freq = n_fft // 2 + 1
    f_pad = _round_up(n_freq, 128)
    w = _dft_basis(n_fft, f_pad).astype(compute_dtype)            # (n_fft, 2*f_pad)

    n_mels_pad = 0
    fb = None
    if use_mel:
        n_mels_pad = _round_up(n_mels, 128)
        fb = _melscale_fbanks(n_freq, 50.0, float(sr // 2), n_mels, sr)
        fb = jnp.pad(fb, ((0, f_pad - n_freq), (0, n_mels_pad - n_mels)))
        fb = fb.astype(compute_dtype)

    itemsize = jnp.dtype(compute_dtype).itemsize
    capacity = _vmem_capacity_bytes()

    def _est_vmem(tk_):
        nk_ = n_fft // tk_
        e = 2 * (2 * tm * tk_ * itemsize)                         # frame tile (2x buffered)
        e += (1 if nk_ == 1 else 2) * (tk_ * 2 * f_pad * itemsize)  # DFT basis chunk(s)
        if use_mel:
            e += f_pad * n_mels_pad * itemsize                    # fbank (single buffered)
        if nk_ > 1:
            e += 2 * tm * 2 * f_pad * 4                           # f32 re/im accumulators
        e += 4 * (2 * tm * f_pad * 4)                             # epilogue f32 temporaries
        n_out = (1 + int(use_log)) * (1 + int(use_mel))
        e += n_out * 8 * max(f_pad, n_mels_pad) * 4               # resident outputs
        return e

    if force_tk is not None:
        tk = force_tk
        assert n_fft % tk == 0 and (tk == n_fft or tk % 128 == 0)
    else:
        tk = n_fft
        target = int(0.7 * capacity)
        while (tk % 2 == 0 and tk // 2 >= 128 and (tk // 2) % 128 == 0
               and _est_vmem(tk) > target):
            tk //= 2
    nk = n_fft // tk
    single_k = (nk == 1)

    inputs = [frames, w]
    in_specs = [
        pl.BlockSpec((2, None, tm, tk),
                     lambda c, i, k: (0, c * inner + i, 0, k)),
        # Block-invariant when single_k: single-buffer it (halves its VMEM footprint).
        _block_spec((tk, 2 * f_pad), lambda c, i, k: (k, 0),
                    n_buffers=1 if single_k else None),
    ]
    out_shapes = [jax.ShapeDtypeStruct((n_chunks, 8, f_pad), jnp.float32)]
    out_specs = [pl.BlockSpec((1, 8, f_pad), lambda c, i, k: (c, 0, 0))]
    if use_log:
        out_shapes.append(jax.ShapeDtypeStruct((n_chunks, 8, f_pad), jnp.float32))
        out_specs.append(pl.BlockSpec((1, 8, f_pad), lambda c, i, k: (c, 0, 0)))
    if use_mel:
        inputs.append(fb)
        in_specs.append(_block_spec((f_pad, n_mels_pad), lambda c, i, k: (0, 0),
                                    n_buffers=1))
        out_shapes.append(jax.ShapeDtypeStruct((n_chunks, 8, n_mels_pad), jnp.float32))
        out_specs.append(pl.BlockSpec((1, 8, n_mels_pad), lambda c, i, k: (c, 0, 0)))
        if use_log:
            out_shapes.append(jax.ShapeDtypeStruct((n_chunks, 8, n_mels_pad), jnp.float32))
            out_specs.append(pl.BlockSpec((1, 8, n_mels_pad), lambda c, i, k: (c, 0, 0)))

    scratch_shapes = [] if single_k else [pltpu.VMEM((tm, 2 * f_pad), jnp.float32),
                                          pltpu.VMEM((tm, 2 * f_pad), jnp.float32)]

    # 80% of per-core VMEM: full basis + big tiles fit on v5e/v6e (~102 MiB) while
    # leaving compiler headroom on v7x (~51 MiB of 64 MiB).
    vmem_limit = int(0.8 * capacity)

    outs = pl.pallas_call(
        functools.partial(_spectral_kernel, use_mel=use_mel, use_log=use_log,
                          power=power, single_k=single_k),
        out_shape=tuple(out_shapes),
        grid_spec=pltpu.PrefetchScalarGridSpec(
            num_scalar_prefetch=0,
            grid=(n_chunks, inner, nk),
            in_specs=in_specs,
            out_specs=tuple(out_specs),
            scratch_shapes=scratch_shapes,
        ),
        compiler_params=pltpu.CompilerParams(
            dimension_semantics=("parallel", "arbitrary", "arbitrary"),
            vmem_limit_bytes=vmem_limit,
        ),
    )(*inputs)

    pos = 0
    denom_spec = float(n_rows * n_freq)            # mean over (B, n_freq, n_frames)
    result = {"stft": jnp.sum(outs[pos]) / denom_spec}
    pos += 1
    if use_log:
        result["log_stft"] = jnp.sum(outs[pos]) / denom_spec
        pos += 1
    if use_mel:
        denom_mel = float(n_rows * n_mels)         # mean over (B, n_mels, n_frames)
        result["mel"] = jnp.sum(outs[pos]) / denom_mel
        pos += 1
        if use_log:
            result["log_mel"] = jnp.sum(outs[pos]) / denom_mel
            pos += 1
    return result


# ----------------------------------------------------------------------------
# SpectralDistances.forward equivalent.
# ----------------------------------------------------------------------------
def spectral_distances(x_inp, x_tar, stft_scales, mel_scales,
                       spec_power=1, mel_dist=True, log_dist=0, sr=16000,
                       compute_dtype=jnp.bfloat16):
    """compute_dtype=bfloat16 (default) feeds the MXU in bf16 with f32 accumulation
    (~1e-2 relative deviation from the f32/torch reference, fine for a training loss).
    Pass compute_dtype=jnp.float32 for reference-accurate results."""
    use_log = log_dist > 0
    loss = jnp.float32(0.0)
    n_scales = 0
    for scale in stft_scales:
        r = _scale_distance(x_inp, x_tar, n_fft=scale, hop=scale // 4, sr=sr,
                            power=spec_power, n_mels=None, use_log=use_log,
                            compute_dtype=compute_dtype)
        loss = loss + r["stft"]
        n_scales += 1
        if use_log:
            loss = loss + r["log_stft"] * log_dist
            n_scales += log_dist
    if mel_dist:
        for scale in mel_scales:
            r = _scale_distance(x_inp, x_tar, n_fft=scale, hop=scale // 4, sr=sr,
                                power=spec_power, n_mels=scale // 4, use_log=use_log,
                                compute_dtype=compute_dtype)
            loss = loss + r["mel"]
            n_scales += 1
            if use_log:
                loss = loss + r["log_mel"] * log_dist
                n_scales += log_dist
    return loss / n_scales


# ----------------------------------------------------------------------------
# Pure-JAX FFT reference (used only for the self-check in __main__).
# ----------------------------------------------------------------------------
def _ref_stft_l1(x_inp, x_tar, n_fft, hop):
    def spec(x):
        pad = n_fft // 2
        xp = jnp.pad(x, ((0, 0), (pad, pad)), mode="reflect")
        n_frames = x.shape[1] // hop + 1
        idx = jnp.arange(n_frames)[:, None] * hop + jnp.arange(n_fft)[None, :]
        fr = xp[:, idx]
        win = 0.5 * (1.0 - jnp.cos(2.0 * jnp.pi * jnp.arange(n_fft) / n_fft))
        return jnp.abs(jnp.fft.rfft(fr * win, axis=-1))
    return jnp.mean(jnp.abs(spec(x_inp) - spec(x_tar)))


if __name__ == "__main__":
    # Small shapes consistent with the module: batch=2 mono signals of 512 samples,
    # scaled-down FFT sizes (module defaults have the same structure, just larger).
    key = jax.random.PRNGKey(0)
    k1, k2 = jax.random.split(key)
    x_inp = jax.random.normal(k1, (2, 512), dtype=jnp.float32)
    x_tar = jax.random.normal(k2, (2, 512), dtype=jnp.float32)

    stft_scales = [256, 128]
    mel_scales = [256]

    # Default path (bf16 MXU inputs, f32 accumulation; log terms skipped).
    loss = spectral_distances(x_inp, x_tar, stft_scales, mel_scales,
                              spec_power=1, mel_dist=True, log_dist=0, sr=16000)
    loss = jax.block_until_ready(loss)
    assert jnp.isfinite(loss)

    # log-distance path with exact f32 compute.
    loss_log = spectral_distances(x_inp, x_tar, stft_scales, mel_scales,
                                  spec_power=1, mel_dist=True, log_dist=1, sr=16000,
                                  compute_dtype=jnp.float32)
    loss_log = jax.block_until_ready(loss_log)
    assert jnp.isfinite(loss_log)

    # f32 single-K path checked against an FFT-based reference.
    r_f32 = _scale_distance(x_inp, x_tar, n_fft=256, hop=64, sr=16000, power=1,
                            n_mels=None, use_log=False, compute_dtype=jnp.float32)
    ref = _ref_stft_l1(x_inp, x_tar, 256, 64)
    ref = jax.block_until_ready(ref)
    assert jnp.allclose(r_f32["stft"], ref, rtol=1e-2, atol=1e-4), (r_f32["stft"], ref)

    # Exercise the K-split (n_fft reduction axis + scratch accumulator) path used for
    # very large scales, and check it matches the single-K result.
    r_split = _scale_distance(x_inp, x_tar, n_fft=256, hop=64, sr=16000, power=1,
                              n_mels=64, use_log=True, compute_dtype=jnp.float32,
                              force_tk=128)
    r_split_stft = jax.block_until_ready(r_split["stft"])
    assert jnp.isfinite(r_split_stft)
    assert jnp.isfinite(jax.block_until_ready(r_split["log_mel"]))
    assert jnp.allclose(r_split_stft, r_f32["stft"], rtol=1e-3), (r_split_stft,
                                                                  r_f32["stft"])

    print("KERNEL_OK")
</pallas_src>

<mosaic_0001>
module attributes {stable_mosaic.version = 11 : i64} {
  func.func @_spectral_kernel(%arg0: i32, %arg1: i32, %arg2: i32, %arg3: memref<2x1x32x256xbf16, #tpu.memory_space<vmem>>, %arg4: memref<256x512xbf16, #tpu.memory_space<vmem>>, %arg5: memref<1x8x256xf32, #tpu.memory_space<vmem>>) attributes {dimension_semantics = [#tpu.dimension_semantics<parallel>, #tpu.dimension_semantics<arbitrary>, #tpu.dimension_semantics<arbitrary>], iteration_bounds = array<i64: 1, 1, 1>, scalar_prefetch = 0 : i64, scratch_operands = 0 : i64, tpu.core_type = #tpu.core_type<tc>, window_params = [{transform_indices = @transform_0, window_bounds = array<i64: 2, 1, 32, 256>}, {pipeline_mode = #tpu.pipeline_mode<synchronous>, transform_indices = @transform_1, window_bounds = array<i64: 256, 512>}, {transform_indices = @transform_2, window_bounds = array<i64: 1, 8, 256>}]} {
    %c0_i32 = arith.constant 0 : i32
    %0 = arith.cmpi eq, %arg1, %c0_i32 : i32
    %c0_i32_0 = arith.constant 0 : i32
    %1 = arith.cmpi eq, %arg2, %c0_i32_0 : i32
    %2 = arith.andi %0, %1 : i1
    %3 = arith.extui %2 : i1 to i32
    %c0_i32_1 = arith.constant 0 : i32
    %4 = arith.cmpi ne, %3, %c0_i32_1 : i32
    scf.if %4 {
      %cst_20 = arith.constant 0.000000e+00 : f32
      %33 = vector.broadcast %cst_20 : f32 to vector<1x8x256xf32>
      %c0_21 = arith.constant 0 : index
      %c0_22 = arith.constant 0 : index
      %c0_23 = arith.constant 0 : index
      %34 = vector.load %arg5[%c0_21, %c0_22, %c0_23] : memref<1x8x256xf32, #tpu.memory_space<vmem>>, vector<1x8x256xf32>
      tpu.vector_store %arg5[%c0_21, %c0_22, %c0_23], %33 {strides = array<i32>} : memref<1x8x256xf32, #tpu.memory_space<vmem>>, vector<1x8x256xf32>,
    } else {
    }
    %c0 = arith.constant 0 : index
    %c0_2 = arith.constant 0 : index
    %c0_3 = arith.constant 0 : index
    %c0_4 = arith.constant 0 : index
    %5 = vector.load %arg3[%c0, %c0_2, %c0_3, %c0_4] : memref<2x1x32x256xbf16, #tpu.memory_space<vmem>>, vector<1x1x32x256xbf16>
    %6 = vector.shape_cast %5 : vector<1x1x32x256xbf16> to vector<32x256xbf16>
    %c0_5 = arith.constant 0 : index
    %c0_6 = arith.constant 0 : index
    %7 = vector.load %arg4[%c0_5, %c0_6] : memref<256x512xbf16, #tpu.memory_space<vmem>>, vector<256x512xbf16>
    %cst = arith.constant dense<0.000000e+00> : vector<32x512xf32>
    %8 = tpu.matmul %6, %7, %cst {dimension_numbers = #tpu.dot_dimension_numbers<[1], [0], [0], [1], [0, 0, 1, 1], [], []>} : vector<32x256xbf16>, vector<256x512xbf16>, vector<32x512xf32> -> vector<32x512xf32>
    %c1 = arith.constant 1 : index
    %c0_7 = arith.constant 0 : index
    %c0_8 = arith.constant 0 : index
    %c0_9 = arith.constant 0 : index
    %9 = vector.load %arg3[%c1, %c0_7, %c0_8, %c0_9] : memref<2x1x32x256xbf16, #tpu.memory_space<vmem>>, vector<1x1x32x256xbf16>
    %10 = vector.shape_cast %9 : vector<1x1x32x256xbf16> to vector<32x256xbf16>
    %c0_10 = arith.constant 0 : index
    %c0_11 = arith.constant 0 : index
    %11 = vector.load %arg4[%c0_10, %c0_11] : memref<256x512xbf16, #tpu.memory_space<vmem>>, vector<256x512xbf16>
    %cst_12 = arith.constant dense<0.000000e+00> : vector<32x512xf32>
    %12 = tpu.matmul %10, %11, %cst_12 {dimension_numbers = #tpu.dot_dimension_numbers<[1], [0], [0], [1], [0, 0, 1, 1], [], []>} : vector<32x256xbf16>, vector<256x512xbf16>, vector<32x512xf32> -> vector<32x512xf32>
    %13 = vector.extract_strided_slice %8 {offsets = [0, 0], sizes = [32, 256], strides = [1, 1]} : vector<32x512xf32> to vector<32x256xf32>
    %14 = vector.extract_strided_slice %8 {offsets = [0, 256], sizes = [32, 256], strides = [1, 1]} : vector<32x512xf32> to vector<32x256xf32>
    %15 = arith.mulf %13, %13 : vector<32x256xf32>
    %16 = arith.mulf %14, %14 : vector<32x256xf32>
    %17 = arith.addf %15, %16 : vector<32x256xf32>
    %18 = math.sqrt %17 : vector<32x256xf32>
    %19 = vector.extract_strided_slice %12 {offsets = [0, 0], sizes = [32, 256], strides = [1, 1]} : vector<32x512xf32> to vector<32x256xf32>
    %20 = vector.extract_strided_slice %12 {offsets = [0, 256], sizes = [32, 256], strides = [1, 1]} : vector<32x512xf32> to vector<32x256xf32>
    %21 = arith.mulf %19, %19 : vector<32x256xf32>
    %22 = arith.mulf %20, %20 : vector<32x256xf32>
    %23 = arith.addf %21, %22 : vector<32x256xf32>
    %24 = math.sqrt %23 : vector<32x256xf32>
    %25 = arith.subf %18, %24 : vector<32x256xf32>
    %26 = math.absf %25 : vector<32x256xf32>
    %27 = vector.shape_cast %26 : vector<32x256xf32> to vector<4x8x256xf32>
    %cst_13 = arith.constant dense<0.000000e+00> : vector<8x256xf32>
    %28 = vector.multi_reduction <add>, %27, %cst_13 [0] : vector<4x8x256xf32> to vector<8x256xf32>
    %c0_14 = arith.constant 0 : index
    %c0_15 = arith.constant 0 : index
    %c0_16 = arith.constant 0 : index
    %29 = vector.load %arg5[%c0_14, %c0_15, %c0_16] : memref<1x8x256xf32, #tpu.memory_space<vmem>>, vector<1x8x256xf32>
    %30 = vector.shape_cast %28 : vector<8x256xf32> to vector<1x8x256xf32>
    %31 = arith.addf %29, %30 : vector<1x8x256xf32>
    %c0_17 = arith.constant 0 : index
    %c0_18 = arith.constant 0 : index
    %c0_19 = arith.constant 0 : index
    %32 = vector.load %arg5[%c0_17, %c0_18, %c0_19] : memref<1x8x256xf32, #tpu.memory_space<vmem>>, vector<1x8x256xf32>
    tpu.vector_store %arg5[%c0_17, %c0_18, %c0_19], %31 {strides = array<i32>} : memref<1x8x256xf32, #tpu.memory_space<vmem>>, vector<1x8x256xf32>,
    return
  }
  func.func @transform_0(%arg0: i32, %arg1: i32, %arg2: i32) -> (i32, i32, i32, i32) {
    %c1_i32 = arith.constant 1 : i32
    %0 = arith.muli %arg0, %c1_i32 : i32
    %1 = arith.addi %0, %arg1 : i32
    %c0_i32 = arith.constant 0 : i32
    %c0_i32_0 = arith.constant 0 : i32
    %c0_i32_1 = arith.constant 0 : i32
    return %c0_i32, %1, %c0_i32_0, %arg2 : i32, i32, i32, i32
  }
  func.func @transform_1(%arg0: i32, %arg1: i32, %arg2: i32) -> (i32, i32) {
    %c0_i32 = arith.constant 0 : i32
    %c0_i32_0 = arith.constant 0 : i32
    return %arg2, %c0_i32 : i32, i32
  }
  func.func @transform_2(%arg0: i32, %arg1: i32, %arg2: i32) -> (i32, i32, i32) {
    %c0_i32 = arith.constant 0 : i32
    %c0_i32_0 = arith.constant 0 : i32
    %c0_i32_1 = arith.constant 0 : i32
    return %arg0, %c0_i32, %c0_i32_0 : i32, i32, i32
  }
}

</mosaic_0001>

<llo_original>
// kernel: tpu_custom_call.1
$region0: #{tpu_custom_call.1}
  #allocation0 [shape = 'u32[]', space=smem, size = 0x4, offset = 0x4, fixed_abs, tag = 'smem constant byte address 0x4 - core index']
  #allocation1 [shape = 'u32[144,128]{1,0:T(1,128)}', space=vmem, size = 0x12000, scoped, tag = 'internal scratch']
  %s0 = inlined_call_operand.hbm [shape: bf16[2,1,32,256], index: 0, kind: input, shape index: {}]
  %s1 = inlined_call_operand.hbm [shape: bf16[256,512], index: 1, kind: input, shape index: {}]
  %s2 = inlined_call_operand.hbm [shape: f32[1,8,256], index: 2, kind: output, shape index: {}]
  %s3 = sld [smem:[#allocation0]]
  $region30: #{tpu_custom_call.1} parent=0
    _
  %s5 = ssub.s32 1, %s3
  %s6 = scalar_select 0, %s5, %s3
  $region1: #{tpu_custom_call.1} parent=0
    #allocation2 [shape = 'u8[32768]{0}', space=vmem, size = 0x8000, scoped, tag = 'input window, operand 0, single buffered']
    #allocation3 [shape = 's32[1]{0}', space=sflag, size = 0x4, scoped, tag = 'scoped memory for tpu_custom_call.1']
    #allocation4 [shape = 's32[1]{0}', space=sflag, size = 0x4, scoped, tag = 'scoped memory for tpu_custom_call.1']
    #allocation5 [shape = 'u8[262144]{0}', space=vmem, size = 0x40000, scoped, tag = 'input window, operand 1, single buffered']
    #allocation6 [shape = 's32[1]{0}', space=sflag, size = 0x4, scoped, tag = 'scoped memory for tpu_custom_call.1']
    #allocation7 [shape = 'u8[8192]{0}', space=vmem, size = 0x2000, scoped, tag = 'output window, operand 0, single buffered']
    %7 = vsyncpa [#allocation3], 0
    %8 = vsyncpa [#allocation6], 0
    %9 = vsyncpa [#allocation4], 0
    // Predicated region
    $region2: #{tpu_custom_call.1} parent=1 // pred_check
      _
    $region3: #{tpu_custom_call.1} parent=1 // pred_check_branch
      %11 = sbr.rel (0) target = $region5
    $region4: #{tpu_custom_call.1} parent=1 // pred_region
      %s12 = sadd.s32 0, 0
      %s14 = ssub.s32 1024, 1024
      %15 = vsyncadd [#allocation3], %s14
      %s16 = smul.addr %s12, 8
      %s17 = smul.addr %s16, 64
      %s18 = scalar_lea.hbm %s0, %s17
      %s19 = sshll.u32 [#allocation2], 4
      %s20 = int_to_ptr.vmem [resolvable:$true] %s19
      %25 = dma.hbm_to_vmem [thread:$0]  %s18, 1024, %s20, [#allocation3], 128, 128, 8
    $region5: #{tpu_custom_call.1} parent=1 // pred_fallthru
      _
    // Predicated region
    $region6: #{tpu_custom_call.1} parent=1 // pred_check
      _
    $region7: #{tpu_custom_call.1} parent=1 // pred_check_branch
      %27 = sbr.rel (0) target = $region9
    $region8: #{tpu_custom_call.1} parent=1 // pred_region
      %s29 = ssub.s32 8192, 8192
      %30 = vsyncadd [#allocation6], %s29
      %s31 = sshll.u32 [#allocation5], 4
      %s32 = int_to_ptr.vmem [resolvable:$true] %s31
      %37 = dma.hbm_to_vmem [thread:$0]  %s1, 8192, %s32, [#allocation6], 256, 256, 16
    $region9: #{tpu_custom_call.1} parent=1 // pred_fallthru
      _
    // Predicated region
    $region10: #{tpu_custom_call.1} parent=1 // pred_check
      _
    $region11: #{tpu_custom_call.1} parent=1 // pred_check_branch
      %39 = sbr.rel (0) target = $region13
    $region12: #{tpu_custom_call.1} parent=1 // pred_region
      %40 = dma.done [#allocation3], 1024
    $region13: #{tpu_custom_call.1} parent=1 // pred_fallthru
      _
    // Predicated region
    $region14: #{tpu_custom_call.1} parent=1 // pred_check
      _
    $region15: #{tpu_custom_call.1} parent=1 // pred_check_branch
      %42 = sbr.rel (0) target = $region17
    $region16: #{tpu_custom_call.1} parent=1 // pred_region
      %43 = dma.done [#allocation6], 8192
    $region17: #{tpu_custom_call.1} parent=1 // pred_fallthru
      _
    %s44 = sadd.s32 0, 0
    %p45 = scmp.eq.s32.totalorder 0, 0
    %p46 = scmp.eq.s32.totalorder 0, 0
    %p47 = pnand %p45, %p46
    %p48 = pneg %p47
    // Predicated region
    $region18: #{tpu_custom_call.1} parent=1 // pred_check
      _
    $region19: #{tpu_custom_call.1} parent=1 // pred_check_branch
      %50 = sbr.rel (%p47) target = $region21
    $region20: #{tpu_custom_call.1} parent=1 // pred_region
      %51 = vst [vmem:[#allocation7] sm:$0xff] 0.0
      %52 = vst [vmem:[#allocation7 + $0x8] sm:$0xff] 0.0
    $region21: #{tpu_custom_call.1} parent=1 // pred_fallthru
      _
    %v53 = vld [vmem:[#allocation2] sm:$0xff]
    %v54 = vld [vmem:[#allocation2 + $0x8] sm:$0xff]
    %v55 = vld [vmem:[#allocation2 + $0x10] sm:$0xff]
    %v56 = vld [vmem:[#allocation2 + $0x18] sm:$0xff]
    %v57 = vld [vmem:[#allocation5] sm:$0xff]
    %v58 = vld [vmem:[#allocation5 + $0x8] sm:$0xff]
    %v59 = vld [vmem:[#allocation5 + $0x10] sm:$0xff]
    %v60 = vld [vmem:[#allocation5 + $0x18] sm:$0xff]
    %v61 = vld [vmem:[#allocation5 + $0x20] sm:$0xff]
    %v62 = vld [vmem:[#allocation5 + $0x28] sm:$0xff]
    %v63 = vld [vmem:[#allocation5 + $0x30] sm:$0xff]
    %v64 = vld [vmem:[#allocation5 + $0x38] sm:$0xff]
    %v65 = vld [vmem:[#allocation5 + $0x40] sm:$0xff]
    %v66 = vld [vmem:[#allocation5 + $0x48] sm:$0xff]
    %v67 = vld [vmem:[#allocation5 + $0x50] sm:$0xff]
    %v68 = vld [vmem:[#allocation5 + $0x58] sm:$0xff]
    %v69 = vld [vmem:[#allocation5 + $0x60] sm:$0xff]
    %v70 = vld [vmem:[#allocation5 + $0x68] sm:$0xff]
    %v71 = vld [vmem:[#allocation5 + $0x70] sm:$0xff]
    %v72 = vld [vmem:[#allocation5 + $0x78] sm:$0xff]
    %v73 = vld [vmem:[#allocation5 + $0x80] sm:$0xff]
    %v74 = vld [vmem:[#allocation5 + $0x88] sm:$0xff]
    %v75 = vld [vmem:[#allocation5 + $0x90] sm:$0xff]
    %v76 = vld [vmem:[#allocation5 + $0x98] sm:$0xff]
    %v77 = vld [vmem:[#allocation5 + $0xa0] sm:$0xff]
    %v78 = vld [vmem:[#allocation5 + $0xa8] sm:$0xff]
    %v79 = vld [vmem:[#allocation5 + $0xb0] sm:$0xff]
    %v80 = vld [vmem:[#allocation5 + $0xb8] sm:$0xff]
    %v81 = vld [vmem:[#allocation5 + $0xc0] sm:$0xff]
    %v82 = vld [vmem:[#allocation5 + $0xc8] sm:$0xff]
    %v83 = vld [vmem:[#allocation5 + $0xd0] sm:$0xff]
    %v84 = vld [vmem:[#allocation5 + $0xd8] sm:$0xff]
    %v85 = vld [vmem:[#allocation5 + $0xe0] sm:$0xff]
    %v86 = vld [vmem:[#allocation5 + $0xe8] sm:$0xff]
    %v87 = vld [vmem:[#allocation5 + $0xf0] sm:$0xff]
    %v88 = vld [vmem:[#allocation5 + $0xf8] sm:$0xff]
    %v89 = vld [vmem:[#allocation5 + $0x100] sm:$0xff]
    %v90 = vld [vmem:[#allocation5 + $0x108] sm:$0xff]
    %v91 = vld [vmem:[#allocation5 + $0x110] sm:$0xff]
    %v92 = vld [vmem:[#allocation5 + $0x118] sm:$0xff]
    %v93 = vld [vmem:[#allocation5 + $0x120] sm:$0xff]
    %v94 = vld [vmem:[#allocation5 + $0x128] sm:$0xff]
    %v95 = vld [vmem:[#allocation5 + $0x130] sm:$0xff]
    %v96 = vld [vmem:[#allocation5 + $0x138] sm:$0xff]
    %v97 = vld [vmem:[#allocation5 + $0x140] sm:$0xff]
    %v98 = vld [vmem:[#allocation5 + $0x148] sm:$0xff]
    %v99 = vld [vmem:[#allocation5 + $0x150] sm:$0xff]
    %v100 = vld [vmem:[#allocation5 + $0x158] sm:$0xff]
    %v101 = vld [vmem:[#allocation5 + $0x160] sm:$0xff]
    %v102 = vld [vmem:[#allocation5 + $0x168] sm:$0xff]
    %v103 = vld [vmem:[#allocation5 + $0x170] sm:$0xff]
    %v104 = vld [vmem:[#allocation5 + $0x178] sm:$0xff]
    %v105 = vld [vmem:[#allocation5 + $0x180] sm:$0xff]
    %v106 = vld [vmem:[#allocation5 + $0x188] sm:$0xff]
    %v107 = vld [vmem:[#allocation5 + $0x190] sm:$0xff]
    %v108 = vld [vmem:[#allocation5 + $0x198] sm:$0xff]
    %v109 = vld [vmem:[#allocation5 + $0x1a0] sm:$0xff]
    %v110 = vld [vmem:[#allocation5 + $0x1a8] sm:$0xff]
    %v111 = vld [vmem:[#allocation5 + $0x1b0] sm:$0xff]
    %v112 = vld [vmem:[#allocation5 + $0x1b8] sm:$0xff]
    %v113 = vld [vmem:[#allocation5 + $0x1c0] sm:$0xff]
    %v114 = vld [vmem:[#allocation5 + $0x1c8] sm:$0xff]
    %v115 = vld [vmem:[#allocation5 + $0x1d0] sm:$0xff]
    %v116 = vld [vmem:[#allocation5 + $0x1d8] sm:$0xff]
    %v117 = vld [vmem:[#allocation5 + $0x1e0] sm:$0xff]
    %v118 = vld [vmem:[#allocation5 + $0x1e8] sm:$0xff]
    %v119 = vld [vmem:[#allocation5 + $0x1f0] sm:$0xff]
    %v120 = vld [vmem:[#allocation5 + $0x1f8] sm:$0xff]
    %v125 = vunpack.c.l.b16 %v53
    %v126 = vunpack.c.h.b16 %v53
    %v127 = vunpack.c.l.b16 %v54
    %v128 = vunpack.c.h.b16 %v54
    %v129 = vunpack.c.l.b16 %v55
    %v130 = vunpack.c.h.b16 %v55
    %v131 = vunpack.c.l.b16 %v56
    %v132 = vunpack.c.h.b16 %v56
    %v133 = vpack.c.b16 %v127, %v125
    %v134 = vpack.c.b16 %v128, %v126
    %v135 = vpack.c.b16 %v131, %v129
    %v136 = vpack.c.b16 %v132, %v130
    %v205 = vunpack.c.l.b16 %v57
    %v206 = vunpack.c.h.b16 %v57
    %v207 = vunpack.c.l.b16 %v58
    %v208 = vunpack.c.h.b16 %v58
    %v209 = vunpack.c.l.b16 %v59
    %v210 = vunpack.c.h.b16 %v59
    %v211 = vunpack.c.l.b16 %v60
    %v212 = vunpack.c.h.b16 %v60
    %v213 = vunpack.c.l.b16 %v61
    %v214 = vunpack.c.h.b16 %v61
    %v215 = vunpack.c.l.b16 %v62
    %v216 = vunpack.c.h.b16 %v62
    %v217 = vunpack.c.l.b16 %v63
    %v218 = vunpack.c.h.b16 %v63
    %v219 = vunpack.c.l.b16 %v64
    %v220 = vunpack.c.h.b16 %v64
    %v221 = vunpack.c.l.b16 %v65
    %v222 = vunpack.c.h.b16 %v65
    %v223 = vunpack.c.l.b16 %v66
    %v224 = vunpack.c.h.b16 %v66
    %v225 = vunpack.c.l.b16 %v67
    %v226 = vunpack.c.h.b16 %v67
    %v227 = vunpack.c.l.b16 %v68
    %v228 = vunpack.c.h.b16 %v68
    %v229 = vunpack.c.l.b16 %v69
    %v230 = vunpack.c.h.b16 %v69
    %v231 = vunpack.c.l.b16 %v70
    %v232 = vunpack.c.h.b16 %v70
    %v233 = vunpack.c.l.b16 %v71
    %v234 = vunpack.c.h.b16 %v71
    %v235 = vunpack.c.l.b16 %v72
    %v236 = vunpack.c.h.b16 %v72
    %v237 = vunpack.c.l.b16 %v73
    %v238 = vunpack.c.h.b16 %v73
    %v239 = vunpack.c.l.b16 %v74
    %v240 = vunpack.c.h.b16 %v74
    %v241 = vunpack.c.l.b16 %v75
    %v242 = vunpack.c.h.b16 %v75
    %v243 = vunpack.c.l.b16 %v76
    %v244 = vunpack.c.h.b16 %v76
    %v245 = vunpack.c.l.b16 %v77
    %v246 = vunpack.c.h.b16 %v77
    %v247 = vunpack.c.l.b16 %v78
    %v248 = vunpack.c.h.b16 %v78
    %v249 = vunpack.c.l.b16 %v79
    %v250 = vunpack.c.h.b16 %v79
    %v251 = vunpack.c.l.b16 %v80
    %v252 = vunpack.c.h.b16 %v80
    %v253 = vunpack.c.l.b16 %v81
    %v254 = vunpack.c.h.b16 %v81
    %v255 = vunpack.c.l.b16 %v82
    %v256 = vunpack.c.h.b16 %v82
    %v257 = vunpack.c.l.b16 %v83
    %v258 = vunpack.c.h.b16 %v83
    %v259 = vunpack.c.l.b16 %v84
    %v260 = vunpack.c.h.b16 %v84
    %v261 = vunpack.c.l.b16 %v85
    %v262 = vunpack.c.h.b16 %v85
    %v263 = vunpack.c.l.b16 %v86
    %v264 = vunpack.c.h.b16 %v86
    %v265 = vunpack.c.l.b16 %v87
    %v266 = vunpack.c.h.b16 %v87
    %v267 = vunpack.c.l.b16 %v88
    %v268 = vunpack.c.h.b16 %v88
    %v269 = vunpack.c.l.b16 %v89
    %v270 = vunpack.c.h.b16 %v89
    %v271 = vunpack.c.l.b16 %v90
    %v272 = vunpack.c.h.b16 %v90
    %v273 = vunpack.c.l.b16 %v91
    %v274 = vunpack.c.h.b16 %v91
    %v275 = vunpack.c.l.b16 %v92
    %v276 = vunpack.c.h.b16 %v92
    %v277 = vunpack.c.l.b16 %v93
    %v278 = vunpack.c.h.b16 %v93
    %v279 = vunpack.c.l.b16 %v94
    %v280 = vunpack.c.h.b16 %v94
    %v281 = vunpack.c.l.b16 %v95
    %v282 = vunpack.c.h.b16 %v95
    %v283 = vunpack.c.l.b16 %v96
    %v284 = vunpack.c.h.b16 %v96
    %v285 = vunpack.c.l.b16 %v97
    %v286 = vunpack.c.h.b16 %v97
    %v287 = vunpack.c.l.b16 %v98
    %v288 = vunpack.c.h.b16 %v98
    %v289 = vunpack.c.l.b16 %v99
    %v290 = vunpack.c.h.b16 %v99
    %v291 = vunpack.c.l.b16 %v100
    %v292 = vunpack.c.h.b16 %v100
    %v293 = vunpack.c.l.b16 %v101
    %v294 = vunpack.c.h.b16 %v101
    %v295 = vunpack.c.l.b16 %v102
    %v296 = vunpack.c.h.b16 %v102
    %v297 = vunpack.c.l.b16 %v103
    %v298 = vunpack.c.h.b16 %v103
    %v299 = vunpack.c.l.b16 %v104
    %v300 = vunpack.c.h.b16 %v104
    %v301 = vunpack.c.l.b16 %v105
    %v302 = vunpack.c.h.b16 %v105
    %v303 = vunpack.c.l.b16 %v106
    %v304 = vunpack.c.h.b16 %v106
    %v305 = vunpack.c.l.b16 %v107
    %v306 = vunpack.c.h.b16 %v107
    %v307 = vunpack.c.l.b16 %v108
    %v308 = vunpack.c.h.b16 %v108
    %v309 = vunpack.c.l.b16 %v109
    %v310 = vunpack.c.h.b16 %v109
    %v311 = vunpack.c.l.b16 %v110
    %v312 = vunpack.c.h.b16 %v110
    %v313 = vunpack.c.l.b16 %v111
    %v314 = vunpack.c.h.b16 %v111
    %v315 = vunpack.c.l.b16 %v112
    %v316 = vunpack.c.h.b16 %v112
    %v317 = vunpack.c.l.b16 %v113
    %v318 = vunpack.c.h.b16 %v113
    %v319 = vunpack.c.l.b16 %v114
    %v320 = vunpack.c.h.b16 %v114
    %v321 = vunpack.c.l.b16 %v115
    %v322 = vunpack.c.h.b16 %v115
    %v323 = vunpack.c.l.b16 %v116
    %v324 = vunpack.c.h.b16 %v116
    %v325 = vunpack.c.l.b16 %v117
    %v326 = vunpack.c.h.b16 %v117
    %v327 = vunpack.c.l.b16 %v118
    %v328 = vunpack.c.h.b16 %v118
    %v329 = vunpack.c.l.b16 %v119
    %v330 = vunpack.c.h.b16 %v119
    %v331 = vunpack.c.l.b16 %v120
    %v332 = vunpack.c.h.b16 %v120
    %v333 = vpack.c.b16 %v209, %v205
    %v334 = vpack.c.b16 %v210, %v206
    %v335 = vpack.c.b16 %v211, %v207
    %v336 = vpack.c.b16 %v212, %v208
    %v337 = vpack.c.b16 %v217, %v213
    %v338 = vpack.c.b16 %v218, %v214
    %v339 = vpack.c.b16 %v219, %v215
    %v340 = vpack.c.b16 %v220, %v216
    %v341 = vpack.c.b16 %v225, %v221
    %v342 = vpack.c.b16 %v226, %v222
    %v343 = vpack.c.b16 %v227, %v223
    %v344 = vpack.c.b16 %v228, %v224
    %v345 = vpack.c.b16 %v233, %v229
    %v346 = vpack.c.b16 %v234, %v230
    %v347 = vpack.c.b16 %v235, %v231
    %v348 = vpack.c.b16 %v236, %v232
    %v349 = vpack.c.b16 %v241, %v237
    %v350 = vpack.c.b16 %v242, %v238
    %v351 = vpack.c.b16 %v243, %v239
    %v352 = vpack.c.b16 %v244, %v240
    %v353 = vpack.c.b16 %v249, %v245
    %v354 = vpack.c.b16 %v250, %v246
    %v355 = vpack.c.b16 %v251, %v247
    %v356 = vpack.c.b16 %v252, %v248
    %v357 = vpack.c.b16 %v257, %v253
    %v358 = vpack.c.b16 %v258, %v254
    %v359 = vpack.c.b16 %v259, %v255
    %v360 = vpack.c.b16 %v260, %v256
    %v361 = vpack.c.b16 %v265, %v261
    %v362 = vpack.c.b16 %v266, %v262
    %v363 = vpack.c.b16 %v267, %v263
    %v364 = vpack.c.b16 %v268, %v264
    %v365 = vpack.c.b16 %v273, %v269
    %v366 = vpack.c.b16 %v274, %v270
    %v367 = vpack.c.b16 %v275, %v271
    %v368 = vpack.c.b16 %v276, %v272
    %v369 = vpack.c.b16 %v281, %v277
    %v370 = vpack.c.b16 %v282, %v278
    %v371 = vpack.c.b16 %v283, %v279
    %v372 = vpack.c.b16 %v284, %v280
    %v373 = vpack.c.b16 %v289, %v285
    %v374 = vpack.c.b16 %v290, %v286
    %v375 = vpack.c.b16 %v291, %v287
    %v376 = vpack.c.b16 %v292, %v288
    %v377 = vpack.c.b16 %v297, %v293
    %v378 = vpack.c.b16 %v298, %v294
    %v379 = vpack.c.b16 %v299, %v295
    %v380 = vpack.c.b16 %v300, %v296
    %v381 = vpack.c.b16 %v305, %v301
    %v382 = vpack.c.b16 %v306, %v302
    %v383 = vpack.c.b16 %v307, %v303
    %v384 = vpack.c.b16 %v308, %v304
    %v385 = vpack.c.b16 %v313, %v309
    %v386 = vpack.c.b16 %v314, %v310
    %v387 = vpack.c.b16 %v315, %v311
    %v388 = vpack.c.b16 %v316, %v312
    %v389 = vpack.c.b16 %v321, %v317
    %v390 = vpack.c.b16 %v322, %v318
    %v391 = vpack.c.b16 %v323, %v319
    %v392 = vpack.c.b16 %v324, %v320
    %v393 = vpack.c.b16 %v329, %v325
    %v394 = vpack.c.b16 %v330, %v326
    %v395 = vpack.c.b16 %v331, %v327
    %v396 = vpack.c.b16 %v332, %v328
    %461 = vmatprep.subr.bf16.mxu0 %v334
    %462 = vmatpush1.bf16.msra.mxu0 %v333
    %463 = vmatprep.subr.bf16.mxu0 %v338
    %464 = vmatpush1.bf16.msra.mxu0 %v337
    %465 = vmatprep.subr.bf16.mxu0 %v342
    %466 = vmatpush1.bf16.msra.mxu0 %v341
    %467 = vmatprep.subr.bf16.mxu0 %v346
    %468 = vmatpush1.bf16.msra.mxu0 %v345
    %469 = vmatprep.subr.bf16.mxu0 %v350
    %470 = vmatpush1.bf16.msra.mxu0 %v349
    %471 = vmatprep.subr.bf16.mxu0 %v354
    %472 = vmatpush1.bf16.msra.mxu0 %v353
    %473 = vmatprep.subr.bf16.mxu0 %v358
    %474 = vmatpush1.bf16.msra.mxu0 %v357
    %475 = vmatprep.subr.bf16.mxu0 %v362
    %476 = vmatpush1.bf16.msra.mxu0 %v361
    %477 = vmatprep.subr.bf16.mxu0 %v366
    %478 = vmatpush1.bf16.msra.mxu0 %v365
    %479 = vmatprep.subr.bf16.mxu0 %v370
    %480 = vmatpush1.bf16.msra.mxu0 %v369
    %481 = vmatprep.subr.bf16.mxu0 %v374
    %482 = vmatpush1.bf16.msra.mxu0 %v373
    %483 = vmatprep.subr.bf16.mxu0 %v378
    %484 = vmatpush1.bf16.msra.mxu0 %v377
    %485 = vmatprep.subr.bf16.mxu0 %v382
    %486 = vmatpush1.bf16.msra.mxu0 %v381
    %487 = vmatprep.subr.bf16.mxu0 %v386
    %488 = vmatpush1.bf16.msra.mxu0 %v385
    %489 = vmatprep.subr.bf16.mxu0 %v390
    %490 = vmatpush1.bf16.msra.mxu0 %v389
    %491 = vmatprep.subr.bf16.mxu0 %v394
    %492 = vmatpush1.bf16.msra.mxu0 %v393
    %493 = vmatprep.mubr.bf16.mxu0 %v134
    %494 = vmatmul.mubr.bf16.gmra.mrb[0].mxu0 %v133
    %v495 = vpop.f32.mrb[0].mxu0
    %v496 = vadd.f32 0.0, %v495
    %v497 = vpop.f32.mrb[0].mxu0
    %v498 = vadd.f32 0.0, %v497
    %v499 = vpop.f32.mrb[0].mxu0
    %v500 = vadd.f32 0.0, %v499
    %v501 = vpop.f32.mrb[0].mxu0
    %v502 = vadd.f32 0.0, %v501
    %503 = vmatprep.mubr.bf16.mxu0 %v136
    %504 = vmatmul.mubr.bf16.gmra.mrb[0].mxu0 %v135
    %v505 = vpop.f32.mrb[0].mxu0
    %v506 = vadd.f32 0.0, %v505
    %v507 = vpop.f32.mrb[0].mxu0
    %v508 = vadd.f32 0.0, %v507
    %v509 = vpop.f32.mrb[0].mxu0
    %v510 = vadd.f32 0.0, %v509
    %v511 = vpop.f32.mrb[0].mxu0
    %v512 = vadd.f32 0.0, %v511
    %513 = vdwg.mxu0
    %514 = vmatprep.subr.bf16.mxu0 %v336
    %515 = vmatpush1.bf16.msra.mxu0 %v335
    %516 = vmatprep.subr.bf16.mxu0 %v340
    %517 = vmatpush1.bf16.msra.mxu0 %v339
    %518 = vmatprep.subr.bf16.mxu0 %v344
    %519 = vmatpush1.bf16.msra.mxu0 %v343
    %520 = vmatprep.subr.bf16.mxu0 %v348
    %521 = vmatpush1.bf16.msra.mxu0 %v347
    %522 = vmatprep.subr.bf16.mxu0 %v352
    %523 = vmatpush1.bf16.msra.mxu0 %v351
    %524 = vmatprep.subr.bf16.mxu0 %v356
    %525 = vmatpush1.bf16.msra.mxu0 %v355
    %526 = vmatprep.subr.bf16.mxu0 %v360
    %527 = vmatpush1.bf16.msra.mxu0 %v359
    %528 = vmatprep.subr.bf16.mxu0 %v364
    %529 = vmatpush1.bf16.msra.mxu0 %v363
    %530 = vmatprep.subr.bf16.mxu0 %v368
    %531 = vmatpush1.bf16.msra.mxu0 %v367
    %532 = vmatprep.subr.bf16.mxu0 %v372
    %533 = vmatpush1.bf16.msra.mxu0 %v371
    %534 = vmatprep.subr.bf16.mxu0 %v376
    %535 = vmatpush1.bf16.msra.mxu0 %v375
    %536 = vmatprep.subr.bf16.mxu0 %v380
    %537 = vmatpush1.bf16.msra.mxu0 %v379
    %538 = vmatprep.subr.bf16.mxu0 %v384
    %539 = vmatpush1.bf16.msra.mxu0 %v383
    %540 = vmatprep.subr.bf16.mxu0 %v388
    %541 = vmatpush1.bf16.msra.mxu0 %v387
    %542 = vmatprep.subr.bf16.mxu0 %v392
    %543 = vmatpush1.bf16.msra.mxu0 %v391
    %544 = vmatprep.subr.bf16.mxu0 %v396
    %545 = vmatpush1.bf16.msra.mxu0 %v395
    %546 = vmatprep.mubr.bf16.mxu0 %v134
    %547 = vmatmul.mubr.bf16.gmra.mrb[0].mxu0 %v133
    %v548 = vpop.f32.mrb[0].mxu0
    %v549 = vadd.f32 0.0, %v548
    %v550 = vpop.f32.mrb[0].mxu0
    %v551 = vadd.f32 0.0, %v550
    %v552 = vpop.f32.mrb[0].mxu0
    %v553 = vadd.f32 0.0, %v552
    %v554 = vpop.f32.mrb[0].mxu0
    %v555 = vadd.f32 0.0, %v554
    %556 = vmatprep.mubr.bf16.mxu0 %v136
    %557 = vmatmul.mubr.bf16.gmra.mrb[0].mxu0 %v135
    %v558 = vpop.f32.mrb[0].mxu0
    %v559 = vadd.f32 0.0, %v558
    %v560 = vpop.f32.mrb[0].mxu0
    %v561 = vadd.f32 0.0, %v560
    %v562 = vpop.f32.mrb[0].mxu0
    %v563 = vadd.f32 0.0, %v562
    %v564 = vpop.f32.mrb[0].mxu0
    %v565 = vadd.f32 0.0, %v564
    %566 = vdwg.mxu0
    %s567 = scalar_lea.vmem [#allocation2], 32
    %v568 = vld [vmem:[%s567] sm:$0xff]
    %v569 = vld [vmem:[%s567 + $0x8] sm:$0xff]
    %v570 = vld [vmem:[%s567 + $0x10] sm:$0xff]
    %v571 = vld [vmem:[%s567 + $0x18] sm:$0xff]
    %v576 = vunpack.c.l.b16 %v568
    %v577 = vunpack.c.h.b16 %v568
    %v578 = vunpack.c.l.b16 %v569
    %v579 = vunpack.c.h.b16 %v569
    %v580 = vunpack.c.l.b16 %v570
    %v581 = vunpack.c.h.b16 %v570
    %v582 = vunpack.c.l.b16 %v571
    %v583 = vunpack.c.h.b16 %v571
    %v584 = vpack.c.b16 %v578, %v576
    %v585 = vpack.c.b16 %v579, %v577
    %v586 = vpack.c.b16 %v582, %v580
    %v587 = vpack.c.b16 %v583, %v581
    %592 = vmatprep.subr.bf16.mxu0 %v334
    %593 = vmatpush1.bf16.msra.mxu0 %v333
    %594 = vmatprep.subr.bf16.mxu0 %v338
    %595 = vmatpush1.bf16.msra.mxu0 %v337
    %596 = vmatprep.subr.bf16.mxu0 %v342
    %597 = vmatpush1.bf16.msra.mxu0 %v341
    %598 = vmatprep.subr.bf16.mxu0 %v346
    %599 = vmatpush1.bf16.msra.mxu0 %v345
    %600 = vmatprep.subr.bf16.mxu0 %v350
    %601 = vmatpush1.bf16.msra.mxu0 %v349
    %602 = vmatprep.subr.bf16.mxu0 %v354
    %603 = vmatpush1.bf16.msra.mxu0 %v353
    %604 = vmatprep.subr.bf16.mxu0 %v358
    %605 = vmatpush1.bf16.msra.mxu0 %v357
    %606 = vmatprep.subr.bf16.mxu0 %v362
    %607 = vmatpush1.bf16.msra.mxu0 %v361
    %608 = vmatprep.subr.bf16.mxu0 %v366
    %609 = vmatpush1.bf16.msra.mxu0 %v365
    %610 = vmatprep.subr.bf16.mxu0 %v370
    %611 = vmatpush1.bf16.msra.mxu0 %v369
    %612 = vmatprep.subr.bf16.mxu0 %v374
    %613 = vmatpush1.bf16.msra.mxu0 %v373
    %614 = vmatprep.subr.bf16.mxu0 %v378
    %615 = vmatpush1.bf16.msra.mxu0 %v377
    %616 = vmatprep.subr.bf16.mxu0 %v382
    %617 = vmatpush1.bf16.msra.mxu0 %v381
    %618 = vmatprep.subr.bf16.mxu0 %v386
    %619 = vmatpush1.bf16.msra.mxu0 %v385
    %620 = vmatprep.subr.bf16.mxu0 %v390
    %621 = vmatpush1.bf16.msra.mxu0 %v389
    %622 = vmatprep.subr.bf16.mxu0 %v394
    %623 = vmatpush1.bf16.msra.mxu0 %v393
    %624 = vmatprep.mubr.bf16.mxu0 %v585
    %625 = vmatmul.mubr.bf16.gmra.mrb[0].mxu0 %v584
    %v626 = vpop.f32.mrb[0].mxu0
    %v627 = vadd.f32 0.0, %v626
    %v628 = vpop.f32.mrb[0].mxu0
    %v629 = vadd.f32 0.0, %v628
    %v630 = vpop.f32.mrb[0].mxu0
    %v631 = vadd.f32 0.0, %v630
    %v632 = vpop.f32.mrb[0].mxu0
    %v633 = vadd.f32 0.0, %v632
    %634 = vmatprep.mubr.bf16.mxu0 %v587
    %635 = vmatmul.mubr.bf16.gmra.mrb[0].mxu0 %v586
    %v636 = vpop.f32.mrb[0].mxu0
    %v637 = vadd.f32 0.0, %v636
    %v638 = vpop.f32.mrb[0].mxu0
    %v639 = vadd.f32 0.0, %v638
    %v640 = vpop.f32.mrb[0].mxu0
    %v641 = vadd.f32 0.0, %v640
    %v642 = vpop.f32.mrb[0].mxu0
    %v643 = vadd.f32 0.0, %v642
    %644 = vdwg.mxu0
    %645 = vmatprep.subr.bf16.mxu0 %v336
    %646 = vmatpush1.bf16.msra.mxu0 %v335
    %647 = vmatprep.subr.bf16.mxu0 %v340
    %648 = vmatpush1.bf16.msra.mxu0 %v339
    %649 = vmatprep.subr.bf16.mxu0 %v344
    %650 = vmatpush1.bf16.msra.mxu0 %v343
    %651 = vmatprep.subr.bf16.mxu0 %v348
    %652 = vmatpush1.bf16.msra.mxu0 %v347
    %653 = vmatprep.subr.bf16.mxu0 %v352
    %654 = vmatpush1.bf16.msra.mxu0 %v351
    %655 = vmatprep.subr.bf16.mxu0 %v356
    %656 = vmatpush1.bf16.msra.mxu0 %v355
    %657 = vmatprep.subr.bf16.mxu0 %v360
    %658 = vmatpush1.bf16.msra.mxu0 %v359
    %659 = vmatprep.subr.bf16.mxu0 %v364
    %660 = vmatpush1.bf16.msra.mxu0 %v363
    %661 = vmatprep.subr.bf16.mxu0 %v368
    %662 = vmatpush1.bf16.msra.mxu0 %v367
    %663 = vmatprep.subr.bf16.mxu0 %v372
    %664 = vmatpush1.bf16.msra.mxu0 %v371
    %665 = vmatprep.subr.bf16.mxu0 %v376
    %666 = vmatpush1.bf16.msra.mxu0 %v375
    %667 = vmatprep.subr.bf16.mxu0 %v380
    %668 = vmatpush1.bf16.msra.mxu0 %v379
    %669 = vmatprep.subr.bf16.mxu0 %v384
    %670 = vmatpush1.bf16.msra.mxu0 %v383
    %671 = vmatprep.subr.bf16.mxu0 %v388
    %672 = vmatpush1.bf16.msra.mxu0 %v387
    %673 = vmatprep.subr.bf16.mxu0 %v392
    %674 = vmatpush1.bf16.msra.mxu0 %v391
    %675 = vmatprep.subr.bf16.mxu0 %v396
    %676 = vmatpush1.bf16.msra.mxu0 %v395
    %677 = vmatprep.mubr.bf16.mxu0 %v585
    %678 = vmatmul.mubr.bf16.gmra.mrb[0].mxu0 %v584
    %v679 = vpop.f32.mrb[0].mxu0
    %v680 = vadd.f32 0.0, %v679
    %v681 = vpop.f32.mrb[0].mxu0
    %v682 = vadd.f32 0.0, %v681
    %v683 = vpop.f32.mrb[0].mxu0
    %v684 = vadd.f32 0.0, %v683
    %v685 = vpop.f32.mrb[0].mxu0
    %v686 = vadd.f32 0.0, %v685
    %687 = vmatprep.mubr.bf16.mxu0 %v587
    %688 = vmatmul.mubr.bf16.gmra.mrb[0].mxu0 %v586
    %v689 = vpop.f32.mrb[0].mxu0
    %v690 = vadd.f32 0.0, %v689
    %v691 = vpop.f32.mrb[0].mxu0
    %v692 = vadd.f32 0.0, %v691
    %v693 = vpop.f32.mrb[0].mxu0
    %v694 = vadd.f32 0.0, %v693
    %v695 = vpop.f32.mrb[0].mxu0
    %v696 = vadd.f32 0.0, %v695
    %697 = vdwg.mxu0
    %v698 = vmul.f32 %v496, %v496
    %v699 = vmul.f32 %v498, %v498
    %v700 = vmul.f32 %v500, %v500
    %v701 = vmul.f32 %v502, %v502
    %v702 = vmul.f32 %v506, %v506
    %v703 = vmul.f32 %v508, %v508
    %v704 = vmul.f32 %v510, %v510
    %v705 = vmul.f32 %v512, %v512
    %v706 = vmul.f32 %v549, %v549
    %v707 = vmul.f32 %v551, %v551
    %v708 = vmul.f32 %v553, %v553
    %v709 = vmul.f32 %v555, %v555
    %v710 = vmul.f32 %v559, %v559
    %v711 = vmul.f32 %v561, %v561
    %v712 = vmul.f32 %v563, %v563
    %v713 = vmul.f32 %v565, %v565
    %v714 = vadd.f32 %v698, %v706
    %v715 = vadd.f32 %v699, %v707
    %v716 = vadd.f32 %v700, %v708
    %v717 = vadd.f32 %v701, %v709
    %v718 = vadd.f32 %v702, %v710
    %v719 = vadd.f32 %v703, %v711
    %v720 = vadd.f32 %v704, %v712
    %v721 = vadd.f32 %v705, %v713
    %v722 = vrsqrt.pop %v714
    %v723 = vmul.f32 %v714, %v722
    %vm724 = vcmp.eq.f32.partialorder %v714, inf
    %v725 = vsel %vm724, %v714, %v723
    %vm726 = vcmp.eq.f32.partialorder %v714, 0.0
    %v727 = vand.u32 %v714, 2147483648
    %v728 = vsel %vm726, %v727, %v725
    %v729 = vrsqrt.pop %v715
    %v730 = vmul.f32 %v715, %v729
    %vm731 = vcmp.eq.f32.partialorder %v715, inf
    %v732 = vsel %vm731, %v715, %v730
    %vm733 = vcmp.eq.f32.partialorder %v715, 0.0
    %v734 = vand.u32 %v715, 2147483648
    %v735 = vsel %vm733, %v734, %v732
    %v736 = vrsqrt.pop %v716
    %v737 = vmul.f32 %v716, %v736
    %vm738 = vcmp.eq.f32.partialorder %v716, inf
    %v739 = vsel %vm738, %v716, %v737
    %vm740 = vcmp.eq.f32.partialorder %v716, 0.0
    %v741 = vand.u32 %v716, 2147483648
    %v742 = vsel %vm740, %v741, %v739
    %v743 = vrsqrt.pop %v717
    %v744 = vmul.f32 %v717, %v743
    %vm745 = vcmp.eq.f32.partialorder %v717, inf
    %v746 = vsel %vm745, %v717, %v744
    %vm747 = vcmp.eq.f32.partialorder %v717, 0.0
    %v748 = vand.u32 %v717, 2147483648
    %v749 = vsel %vm747, %v748, %v746
    %v750 = vrsqrt.pop %v718
    %v751 = vmul.f32 %v718, %v750
    %vm752 = vcmp.eq.f32.partialorder %v718, inf
    %v753 = vsel %vm752, %v718, %v751
    %vm754 = vcmp.eq.f32.partialorder %v718, 0.0
    %v755 = vand.u32 %v718, 2147483648
    %v756 = vsel %vm754, %v755, %v753
    %v757 = vrsqrt.pop %v719
    %v758 = vmul.f32 %v719, %v757
    %vm759 = vcmp.eq.f32.partialorder %v719, inf
    %v760 = vsel %vm759, %v719, %v758
    %vm761 = vcmp.eq.f32.partialorder %v719, 0.0
    %v762 = vand.u32 %v719, 2147483648
    %v763 = vsel %vm761, %v762, %v760
    %v764 = vrsqrt.pop %v720
    %v765 = vmul.f32 %v720, %v764
    %vm766 = vcmp.eq.f32.partialorder %v720, inf
    %v767 = vsel %vm766, %v720, %v765
    %vm768 = vcmp.eq.f32.partialorder %v720, 0.0
    %v769 = vand.u32 %v720, 2147483648
    %v770 = vsel %vm768, %v769, %v767
    %v771 = vrsqrt.pop %v721
    %v772 = vmul.f32 %v721, %v771
    %vm773 = vcmp.eq.f32.partialorder %v721, inf
    %v774 = vsel %vm773, %v721, %v772
    %vm775 = vcmp.eq.f32.partialorder %v721, 0.0
    %v776 = vand.u32 %v721, 2147483648
    %v777 = vsel %vm775, %v776, %v774
    %v778 = vmul.f32 %v627, %v627
    %v779 = vmul.f32 %v629, %v629
    %v780 = vmul.f32 %v631, %v631
    %v781 = vmul.f32 %v633, %v633
    %v782 = vmul.f32 %v637, %v637
    %v783 = vmul.f32 %v639, %v639
    %v784 = vmul.f32 %v641, %v641
    %v785 = vmul.f32 %v643, %v643
    %v786 = vmul.f32 %v680, %v680
    %v787 = vmul.f32 %v682, %v682
    %v788 = vmul.f32 %v684, %v684
    %v789 = vmul.f32 %v686, %v686
    %v790 = vmul.f32 %v690, %v690
    %v791 = vmul.f32 %v692, %v692
    %v792 = vmul.f32 %v694, %v694
    %v793 = vmul.f32 %v696, %v696
    %v794 = vadd.f32 %v778, %v786
    %v795 = vadd.f32 %v779, %v787
    %v796 = vadd.f32 %v780, %v788
    %v797 = vadd.f32 %v781, %v789
    %v798 = vadd.f32 %v782, %v790
    %v799 = vadd.f32 %v783, %v791
    %v800 = vadd.f32 %v784, %v792
    %v801 = vadd.f32 %v785, %v793
    %v802 = vrsqrt.pop %v794
    %v803 = vmul.f32 %v794, %v802
    %vm804 = vcmp.eq.f32.partialorder %v794, inf
    %v805 = vsel %vm804, %v794, %v803
    %vm806 = vcmp.eq.f32.partialorder %v794, 0.0
    %v807 = vand.u32 %v794, 2147483648
    %v808 = vsel %vm806, %v807, %v805
    %v809 = vrsqrt.pop %v795
    %v810 = vmul.f32 %v795, %v809
    %vm811 = vcmp.eq.f32.partialorder %v795, inf
    %v812 = vsel %vm811, %v795, %v810
    %vm813 = vcmp.eq.f32.partialorder %v795, 0.0
    %v814 = vand.u32 %v795, 2147483648
    %v815 = vsel %vm813, %v814, %v812
    %v816 = vrsqrt.pop %v796
    %v817 = vmul.f32 %v796, %v816
    %vm818 = vcmp.eq.f32.partialorder %v796, inf
    %v819 = vsel %vm818, %v796, %v817
    %vm820 = vcmp.eq.f32.partialorder %v796, 0.0
    %v821 = vand.u32 %v796, 2147483648
    %v822 = vsel %vm820, %v821, %v819
    %v823 = vrsqrt.pop %v797
    %v824 = vmul.f32 %v797, %v823
    %vm825 = vcmp.eq.f32.partialorder %v797, inf
    %v826 = vsel %vm825, %v797, %v824
    %vm827 = vcmp.eq.f32.partialorder %v797, 0.0
    %v828 = vand.u32 %v797, 2147483648
    %v829 = vsel %vm827, %v828, %v826
    %v830 = vrsqrt.pop %v798
    %v831 = vmul.f32 %v798, %v830
    %vm832 = vcmp.eq.f32.partialorder %v798, inf
    %v833 = vsel %vm832, %v798, %v831
    %vm834 = vcmp.eq.f32.partialorder %v798, 0.0
    %v835 = vand.u32 %v798, 2147483648
    %v836 = vsel %vm834, %v835, %v833
    %v837 = vrsqrt.pop %v799
    %v838 = vmul.f32 %v799, %v837
    %vm839 = vcmp.eq.f32.partialorder %v799, inf
    %v840 = vsel %vm839, %v799, %v838
    %vm841 = vcmp.eq.f32.partialorder %v799, 0.0
    %v842 = vand.u32 %v799, 2147483648
    %v843 = vsel %vm841, %v842, %v840
    %v844 = vrsqrt.pop %v800
    %v845 = vmul.f32 %v800, %v844
    %vm846 = vcmp.eq.f32.partialorder %v800, inf
    %v847 = vsel %vm846, %v800, %v845
    %vm848 = vcmp.eq.f32.partialorder %v800, 0.0
    %v849 = vand.u32 %v800, 2147483648
    %v850 = vsel %vm848, %v849, %v847
    %v851 = vrsqrt.pop %v801
    %v852 = vmul.f32 %v801, %v851
    %vm853 = vcmp.eq.f32.partialorder %v801, inf
    %v854 = vsel %vm853, %v801, %v852
    %vm855 = vcmp.eq.f32.partialorder %v801, 0.0
    %v856 = vand.u32 %v801, 2147483648
    %v857 = vsel %vm855, %v856, %v854
    %v858 = vsub.f32 %v728, %v808
    %v859 = vsub.f32 %v735, %v815
    %v860 = vsub.f32 %v742, %v822
    %v861 = vsub.f32 %v749, %v829
    %v862 = vsub.f32 %v756, %v836
    %v863 = vsub.f32 %v763, %v843
    %v864 = vsub.f32 %v770, %v850
    %v865 = vsub.f32 %v777, %v857
    %v866 = vand.u32 2147483647, %v858
    %v867 = vand.u32 2147483647, %v859
    %v868 = vand.u32 2147483647, %v860
    %v869 = vand.u32 2147483647, %v861
    %v870 = vand.u32 2147483647, %v862
    %v871 = vand.u32 2147483647, %v863
    %v872 = vand.u32 2147483647, %v864
    %v873 = vand.u32 2147483647, %v865
    %v874 = vadd.f32 %v866, %v868
    %v875 = vadd.f32 %v874, %v870
    %v876 = vadd.f32 %v875, %v872
    %v877 = vadd.f32 %v867, %v869
    %v878 = vadd.f32 %v877, %v871
    %v879 = vadd.f32 %v878, %v873
    %v880 = vld [vmem:[#allocation7] sm:$0xff]
    %v881 = vld [vmem:[#allocation7 + $0x8] sm:$0xff]
    %v882 = vadd.f32 %v880, %v876
    %v883 = vadd.f32 %v881, %v879
    %884 = vst [vmem:[#allocation7] sm:$0xff] %v882
    %885 = vst [vmem:[#allocation7 + $0x8] sm:$0xff] %v883
    // Predicated region
    $region22: #{tpu_custom_call.1} parent=1 // pred_check
      _
    $region23: #{tpu_custom_call.1} parent=1 // pred_check_branch
      %887 = sbr.rel (0) target = $region25
    $region24: #{tpu_custom_call.1} parent=1 // pred_region
      %s889 = ssub.s32 256, 256
      %890 = vsyncadd [#allocation4], %s889
      %s892 = sshll.u32 [#allocation7], 4
      %s893 = int_to_ptr.vmem [resolvable:$true] %s892
      %895 = dma.vmem_to_hbm [thread:$0]  %s893, 256, %s2, [#allocation4]
    $region25: #{tpu_custom_call.1} parent=1 // pred_fallthru
      _
    // Predicated region
    $region26: #{tpu_custom_call.1} parent=1 // pred_check
      _
    $region27: #{tpu_custom_call.1} parent=1 // pred_check_branch
      %897 = sbr.rel (0) target = $region29
    $region28: #{tpu_custom_call.1} parent=1 // pred_region
      %898 = dma.done [#allocation4], 256
    $region29: #{tpu_custom_call.1} parent=1 // pred_fallthru
      _
    %899 = vsyncpa [#allocation3], 1
    %900 = vsyncpa [#allocation6], 1
    %901 = vsyncpa [#allocation4], 1

</llo_original>
